<compile_context>
chip_gen: v7x
topology: tpu7x:2x2x1
jax: 0.10.0
libtpu: 0.0.40
codegen_flags: <defaults>
</compile_context>

<pallas_src>
import functools

import jax
import jax.numpy as jnp
from jax.experimental import pallas as pl
from jax.experimental.pallas import tpu as pltpu


def _round_up(x, m):
    return (x + m - 1) // m * m


# ---------------------------------------------------------------------------
# Pass 1: tiled conv (one MXU matmul per (row, cout, k) tile) + BN partials.
# ---------------------------------------------------------------------------
def _conv_stats_kernel(p_ref, w_ref, y_ref, stats_ref, acc_ref):
    """p_ref: (TM, TK) im2col patches.   w_ref: (TK, TN) weights.
       y_ref: (TM, TN) conv output tile. stats_ref: (1, 2, TN) [sum, sum_sq].
       acc_ref: (TM, TN) f32 VMEM accumulator, resident across the K axis."""
    k = pl.program_id(2)

    @pl.when(k == 0)
    def _():
        acc_ref[...] = jnp.zeros_like(acc_ref)

    acc_ref[...] += jnp.dot(p_ref[...], w_ref[...],
                            preferred_element_type=jnp.float32)

    @pl.when(k == pl.num_programs(2) - 1)
    def _():
        y = acc_ref[...]
        y_ref[...] = y.astype(y_ref.dtype)
        s = jnp.sum(y, axis=0, keepdims=True)        # (1, TN)
        ss = jnp.sum(y * y, axis=0, keepdims=True)   # (1, TN)
        stats_ref[...] = jnp.concatenate([s, ss], axis=0)[None]


# ---------------------------------------------------------------------------
# Pass 2: folded BN (scale/shift) + ReLU epilogue, lane-dense stores.
# ---------------------------------------------------------------------------
def _bn_act_kernel(y_ref, scale_ref, shift_ref, o_ref):
    o_ref[...] = jnp.maximum(
        y_ref[...] * scale_ref[...] + shift_ref[...], 0.0).astype(o_ref.dtype)


def conv_bn_act_block(x_nchw, weight_oihw, gamma, beta,
                      *, stride=1, padding=1, eps=1e-5,
                      tile_rows=256, tile_cout=128, tile_k=512,
                      mxu_dtype=None):
    """ConvBnActBlock forward.
       x_nchw: (N, Cin, H, W).  weight_oihw: (Cout, Cin, KH, KW) (PyTorch).
       Returns (N, Cout, Ho, Wo), NCHW like PyTorch.
       mxu_dtype=jnp.bfloat16 is recommended on v6e/v7x (accumulation stays
       f32); default None keeps f32 matmul inputs for bit-tight validation."""
    N, Cin, H, W = x_nchw.shape
    Cout, Cin_w, KH, KW = weight_oihw.shape
    assert Cin == Cin_w  # TODO(synk): groups != 1 (grouped conv) not implemented.
    Ho = (H + 2 * padding - KH) // stride + 1
    Wo = (W + 2 * padding - KW) // stride + 1
    rows = N * Ho * Wo
    K = KH * KW * Cin

    # --- wrapper-side layout glue: NCHW -> NHWC, zero pad, im2col -----------
    # (kept at the module boundary only because the spec is PyTorch-NCHW; in a
    # full network keep activations NHWC end-to-end and skip this round trip.)
    x_nhwc = jnp.transpose(x_nchw, (0, 2, 3, 1))
    x_pad = jnp.pad(x_nhwc,
                    ((0, 0), (padding, padding), (padding, padding), (0, 0)))
    taps = []
    for kh in range(KH):
        for kw in range(KW):
            taps.append(
                x_pad[:, kh:kh + (Ho - 1) * stride + 1:stride,
                      kw:kw + (Wo - 1) * stride + 1:stride, :])
    patches = jnp.concatenate(taps, axis=-1).reshape(rows, K)   # [kh,kw,cin]
    w2d = jnp.transpose(weight_oihw, (2, 3, 1, 0)).reshape(K, Cout)

    # --- tile geometry (lane-dense last dims, 8-aligned sublane dims) -------
    TN = min(tile_cout, _round_up(Cout, 128))
    TK = min(tile_k, _round_up(K, 128))
    TM = min(tile_rows, _round_up(rows, 8))
    Cout_p = _round_up(Cout, TN)
    K_p = _round_up(K, TK)
    rows_p = _round_up(rows, TM)
    r_tiles, c_tiles, k_tiles = rows_p // TM, Cout_p // TN, K_p // TK

    patches = jnp.pad(patches, ((0, rows_p - rows), (0, K_p - K)))
    w2d = jnp.pad(w2d, ((0, K_p - K), (0, Cout_p - Cout)))
    if mxu_dtype is not None:
        patches = patches.astype(mxu_dtype)
        w2d = w2d.astype(mxu_dtype)

    cparams3 = pltpu.CompilerParams(
        dimension_semantics=("parallel", "parallel", "arbitrary"),
        vmem_limit_bytes=32 * 1024 * 1024)
    cparams2 = pltpu.CompilerParams(
        dimension_semantics=("parallel", "parallel"),
        vmem_limit_bytes=32 * 1024 * 1024)

    # --- pass 1: conv + per-tile BN partial statistics -----------------------
    y2d, stats = pl.pallas_call(
        _conv_stats_kernel,
        grid=(r_tiles, c_tiles, k_tiles),
        in_specs=[pl.BlockSpec((TM, TK), lambda r, c, k: (r, k)),
                  pl.BlockSpec((TK, TN), lambda r, c, k: (k, c))],
        out_specs=(pl.BlockSpec((TM, TN), lambda r, c, k: (r, c)),
                   pl.BlockSpec((1, 2, TN), lambda r, c, k: (r, 0, c))),
        out_shape=(jax.ShapeDtypeStruct((rows_p, Cout_p), jnp.float32),
                   jax.ShapeDtypeStruct((r_tiles, 2, Cout_p), jnp.float32)),
        scratch_shapes=[pltpu.VMEM((TM, TN), jnp.float32)],
        compiler_params=cparams3,
    )(patches, w2d)

    # --- global BN statistics from tiny per-tile partials (glue-sized jnp) ---
    totals = jnp.sum(stats, axis=0)                      # (2, Cout_p)
    cnt = jnp.float32(rows)                              # real rows only
    mean = totals[0] / cnt
    var = jnp.maximum(totals[1] / cnt - mean * mean, 0.0)  # biased var, guarded
    gamma_p = jnp.pad(gamma.astype(jnp.float32), (0, Cout_p - Cout))
    beta_p = jnp.pad(beta.astype(jnp.float32), (0, Cout_p - Cout))
    inv = jax.lax.rsqrt(var + eps)
    scale = (gamma_p * inv).reshape(1, Cout_p)
    shift = (beta_p - mean * gamma_p * inv).reshape(1, Cout_p)

    # --- pass 2: normalize (folded scale/shift) + ReLU ------------------------
    out2d = pl.pallas_call(
        _bn_act_kernel,
        grid=(r_tiles, c_tiles),
        in_specs=[pl.BlockSpec((TM, TN), lambda r, c: (r, c)),
                  pl.BlockSpec((1, TN), lambda r, c: (0, c)),
                  pl.BlockSpec((1, TN), lambda r, c: (0, c))],
        out_specs=pl.BlockSpec((TM, TN), lambda r, c: (r, c)),
        out_shape=jax.ShapeDtypeStruct((rows_p, Cout_p), jnp.float32),
        compiler_params=cparams2,
    )(y2d, scale, shift)

    out = out2d[:rows, :Cout].reshape(N, Ho, Wo, Cout)
    return jnp.transpose(out, (0, 3, 1, 2))


def _reference(x_nchw, weight_oihw, gamma, beta, *, stride, padding, eps):
    """Pure-JAX reference (conv + training-mode BN + ReLU) for validation."""
    y = jax.lax.conv_general_dilated(
        x_nchw, weight_oihw,
        window_strides=(stride, stride),
        padding=((padding, padding), (padding, padding)),
        dimension_numbers=("NCHW", "OIHW", "NCHW"),
    )
    mean = jnp.mean(y, axis=(0, 2, 3), keepdims=True)
    var = jnp.mean((y - mean) ** 2, axis=(0, 2, 3), keepdims=True)
    yn = (y - mean) * jax.lax.rsqrt(var + eps)
    yn = yn * gamma.reshape(1, -1, 1, 1) + beta.reshape(1, -1, 1, 1)
    return jnp.maximum(yn, 0.0)


if __name__ == "__main__":
    # ConvBnActBlock(inplanes=4, planes=8, kernel_size=3, stride=1, padding=1,
    #                groups=1, has_bn=True, has_act=True)
    N, Cin, H, W = 2, 4, 16, 16
    Cout, KH, KW = 8, 3, 3
    stride, padding, eps = 1, 1, 1e-5

    key = jax.random.PRNGKey(0)
    kx, kw = jax.random.split(key)
    x = jax.random.normal(kx, (N, Cin, H, W), jnp.float32)
    weight = 0.1 * jax.random.normal(kw, (Cout, Cin, KH, KW), jnp.float32)
    gamma = 1.0 + 0.1 * jnp.arange(Cout, dtype=jnp.float32)
    beta = 0.05 * jnp.arange(Cout, dtype=jnp.float32)

    out = conv_bn_act_block(x, weight, gamma, beta,
                            stride=stride, padding=padding, eps=eps)
    out = jax.block_until_ready(out)

    ref = _reference(x, weight, gamma, beta,
                     stride=stride, padding=padding, eps=eps)
    assert out.shape == (N, Cout, H, W)
    assert jnp.allclose(out, ref, atol=1e-4, rtol=1e-4), "mismatch vs reference"

    print("KERNEL_OK")
</pallas_src>

<mosaic_0001>
module attributes {stable_mosaic.version = 11 : i64} {
  func.func @_conv_stats_kernel(%arg0: i32, %arg1: i32, %arg2: i32, %arg3: memref<256x128xf32, #tpu.memory_space<vmem>>, %arg4: memref<128x128xf32, #tpu.memory_space<vmem>>, %arg5: memref<256x128xf32, #tpu.memory_space<vmem>>, %arg6: memref<1x2x128xf32, #tpu.memory_space<vmem>>, %arg7: memref<256x128xf32, #tpu.memory_space<vmem>>) attributes {dimension_semantics = [#tpu.dimension_semantics<parallel>, #tpu.dimension_semantics<parallel>, #tpu.dimension_semantics<arbitrary>], iteration_bounds = array<i64: 2, 1, 1>, scalar_prefetch = 0 : i64, scratch_operands = 1 : i64, tpu.core_type = #tpu.core_type<tc>, window_params = [{transform_indices = @transform_0, window_bounds = array<i64: 256, 128>}, {transform_indices = @transform_1, window_bounds = array<i64: 128, 128>}, {transform_indices = @transform_2, window_bounds = array<i64: 256, 128>}, {transform_indices = @transform_3, window_bounds = array<i64: 1, 2, 128>}]} {
    %c0_i32 = arith.constant 0 : i32
    %0 = arith.cmpi eq, %arg2, %c0_i32 : i32
    %1 = arith.extui %0 : i1 to i32
    %c0_i32_0 = arith.constant 0 : i32
    %2 = arith.cmpi ne, %1, %c0_i32_0 : i32
    scf.if %2 {
      %cst_10 = arith.constant 0.000000e+00 : f32
      %12 = vector.broadcast %cst_10 : f32 to vector<256x128xf32>
      %c0_11 = arith.constant 0 : index
      %c0_12 = arith.constant 0 : index
      %13 = vector.load %arg7[%c0_11, %c0_12] : memref<256x128xf32, #tpu.memory_space<vmem>>, vector<256x128xf32>
      tpu.vector_store %arg7[%c0_11, %c0_12], %12 {strides = array<i32>} : memref<256x128xf32, #tpu.memory_space<vmem>>, vector<256x128xf32>,
    } else {
    }
    %c0 = arith.constant 0 : index
    %c0_1 = arith.constant 0 : index
    %3 = vector.load %arg7[%c0, %c0_1] : memref<256x128xf32, #tpu.memory_space<vmem>>, vector<256x128xf32>
    %c0_2 = arith.constant 0 : index
    %c0_3 = arith.constant 0 : index
    %4 = vector.load %arg3[%c0_2, %c0_3] : memref<256x128xf32, #tpu.memory_space<vmem>>, vector<256x128xf32>
    %c0_4 = arith.constant 0 : index
    %c0_5 = arith.constant 0 : index
    %5 = vector.load %arg4[%c0_4, %c0_5] : memref<128x128xf32, #tpu.memory_space<vmem>>, vector<128x128xf32>
    %cst = arith.constant dense<0.000000e+00> : vector<256x128xf32>
    %6 = tpu.matmul %4, %5, %cst {dimension_numbers = #tpu.dot_dimension_numbers<[1], [0], [0], [1], [0, 0, 1, 1], [], []>} : vector<256x128xf32>, vector<128x128xf32>, vector<256x128xf32> -> vector<256x128xf32>
    %7 = arith.addf %3, %6 : vector<256x128xf32>
    %c0_6 = arith.constant 0 : index
    %c0_7 = arith.constant 0 : index
    %8 = vector.load %arg7[%c0_6, %c0_7] : memref<256x128xf32, #tpu.memory_space<vmem>>, vector<256x128xf32>
    tpu.vector_store %arg7[%c0_6, %c0_7], %7 {strides = array<i32>} : memref<256x128xf32, #tpu.memory_space<vmem>>, vector<256x128xf32>,
    %c0_i32_8 = arith.constant 0 : i32
    %9 = arith.cmpi eq, %arg2, %c0_i32_8 : i32
    %10 = arith.extui %9 : i1 to i32
    %c0_i32_9 = arith.constant 0 : i32
    %11 = arith.cmpi ne, %10, %c0_i32_9 : i32
    scf.if %11 {
      %c0_10 = arith.constant 0 : index
      %c0_11 = arith.constant 0 : index
      %12 = vector.load %arg7[%c0_10, %c0_11] : memref<256x128xf32, #tpu.memory_space<vmem>>, vector<256x128xf32>
      %c0_12 = arith.constant 0 : index
      %c0_13 = arith.constant 0 : index
      %13 = vector.load %arg5[%c0_12, %c0_13] : memref<256x128xf32, #tpu.memory_space<vmem>>, vector<256x128xf32>
      tpu.vector_store %arg5[%c0_12, %c0_13], %12 {strides = array<i32>} : memref<256x128xf32, #tpu.memory_space<vmem>>, vector<256x128xf32>,
      %cst_14 = arith.constant dense<0.000000e+00> : vector<128xf32>
      %14 = vector.multi_reduction <add>, %12, %cst_14 [0] : vector<256x128xf32> to vector<128xf32>
      %15 = vector.shape_cast %14 : vector<128xf32> to vector<1x128xf32>
      %16 = arith.mulf %12, %12 : vector<256x128xf32>
      %cst_15 = arith.constant dense<0.000000e+00> : vector<128xf32>
      %17 = vector.multi_reduction <add>, %16, %cst_15 [0] : vector<256x128xf32> to vector<128xf32>
      %18 = vector.shape_cast %17 : vector<128xf32> to vector<1x128xf32>
      %19 = tpu.concatenate %15, %18 in 0 : vector<1x128xf32>, vector<1x128xf32> -> vector<2x128xf32>
      %20 = vector.shape_cast %19 : vector<2x128xf32> to vector<1x2x128xf32>
      %c0_16 = arith.constant 0 : index
      %c0_17 = arith.constant 0 : index
      %c0_18 = arith.constant 0 : index
      %21 = vector.load %arg6[%c0_16, %c0_17, %c0_18] : memref<1x2x128xf32, #tpu.memory_space<vmem>>, vector<1x2x128xf32>
      tpu.vector_store %arg6[%c0_16, %c0_17, %c0_18], %20 {strides = array<i32>} : memref<1x2x128xf32, #tpu.memory_space<vmem>>, vector<1x2x128xf32>,
    } else {
    }
    return
  }
  func.func @transform_0(%arg0: i32, %arg1: i32, %arg2: i32) -> (i32, i32) {
    %c0_i32 = arith.constant 0 : i32
    return %arg0, %arg2 : i32, i32
  }
  func.func @transform_1(%arg0: i32, %arg1: i32, %arg2: i32) -> (i32, i32) {
    %c0_i32 = arith.constant 0 : i32
    return %arg2, %arg1 : i32, i32
  }
  func.func @transform_2(%arg0: i32, %arg1: i32, %arg2: i32) -> (i32, i32) {
    %c0_i32 = arith.constant 0 : i32
    return %arg0, %arg1 : i32, i32
  }
  func.func @transform_3(%arg0: i32, %arg1: i32, %arg2: i32) -> (i32, i32, i32) {
    %c0_i32 = arith.constant 0 : i32
    %c0_i32_0 = arith.constant 0 : i32
    return %arg0, %c0_i32, %arg1 : i32, i32, i32
  }
}

</mosaic_0001>

<llo_original>
// kernel: tpu_custom_call.1
$region0: #{tpu_custom_call.1}
  #allocation0 [shape = 'u32[]', space=smem, size = 0x4, offset = 0x4, fixed_abs, tag = 'smem constant byte address 0x4 - core index']
  #allocation1 [shape = 'u32[144,128]{1,0:T(1,128)}', space=vmem, size = 0x12000, scoped, tag = 'internal scratch']
  #allocation2 [shape = 'f32[256,128]{1,0:T(8,128)}', space=vmem, size = 0x20000, scoped, tag = 'scratch operand']
  %s0 = inlined_call_operand.hbm [shape: f32[512,128], index: 0, kind: input, shape index: {}]
  %s1 = inlined_call_operand.hbm [shape: f32[128,128], index: 1, kind: input, shape index: {}]
  %s2 = inlined_call_operand.hbm [shape: f32[512,128], index: 2, kind: output, shape index: {0}]
  %s3 = inlined_call_operand.hbm [shape: f32[2,2,128], index: 3, kind: output, shape index: {1}]
  %4 = xla_tuple %s2, %s3
  %s5 = sld [smem:[#allocation0]]
  $region65: #{tpu_custom_call.1} parent=0
    _
  %s7 = ssub.s32 1, %s5
  %s8 = scalar_select 0, %s7, %s5
  $region1: #{tpu_custom_call.1} parent=0
    #allocation3 [shape = 'u8[262144]{0}', space=vmem, size = 0x40000, scoped, tag = 'input window, operand 0']
    #allocation4 [shape = 's32[2]{0}', space=sflag, size = 0x8, scoped, tag = 'scoped memory for tpu_custom_call.1']
    #allocation5 [shape = 's32[2]{0}', space=sflag, size = 0x8, scoped, tag = 'scoped memory for tpu_custom_call.1']
    #allocation6 [shape = 'u8[65536]{0}', space=vmem, size = 0x10000, scoped, tag = 'input window, operand 1, single buffered']
    #allocation7 [shape = 's32[1]{0}', space=sflag, size = 0x4, scoped, tag = 'scoped memory for tpu_custom_call.1']
    #allocation8 [shape = 'u8[262144]{0}', space=vmem, size = 0x40000, scoped, tag = 'output window, operand 0']
    #allocation9 [shape = 'u8[2048]{0}', space=vmem, size = 0x800, scoped, tag = 'output window, operand 1']
    #allocation10 [shape = 's32[2]{0}', space=sflag, size = 0x8, scoped, tag = 'scoped memory for tpu_custom_call.1']
    %9 = vsyncpa [#allocation4], 0
    %s10 = scalar_lea.sflag [#allocation4], 1
    %11 = vsyncpa %s10, 0
    %12 = vsyncpa [#allocation7], 0
    %13 = vsyncpa [#allocation5], 0
    %s14 = scalar_lea.sflag [#allocation5], 1
    %15 = vsyncpa %s14, 0
    %16 = vsyncpa [#allocation10], 0
    %s17 = scalar_lea.sflag [#allocation10], 1
    %18 = vsyncpa %s17, 0
    loop: start=0, step=1, limit=4
    $region2: #{tpu_custom_call.1} parent=1 // loop_pre_header
      _
    $region3: #{tpu_custom_call.1} parent=1 // loop_header
      %s20 = sphi 0, %s24
      %p21 = scmp.ge.s32.totalorder %s20, 4
      %s27 = sphi 0, %s46
      %s28 = sphi 0, %s42
      %s29 = sphi 0, %s38
      %s30 = sphi 0, %s27
      %s31 = sphi 0, %s28
      %s32 = sphi 0, %s29
      %s33 = sphi 0, %s30
      %s34 = sphi 0, %s31
      %s35 = sphi 0, %s32
      %s51 = sphi 0, %s53
      %s54 = sphi 0, %s51
      %s55 = sphi 0, %s54
      %s71 = sphi 0, %s55
      %s79 = sphi 0, %s81
      %s82 = sphi 0, %s79
      %s83 = sphi 0, %s82
      %s99 = sphi 0, %s83
      %s107 = sphi 0, %s109
      %s110 = sphi 0, %s107
      %s111 = sphi 0, %s110
      %s127 = sphi 0, %s111
      %s135 = sphi 0, %s137
      %s138 = sphi 0, %s135
      %s139 = sphi 0, %s138
      %s155 = sphi 0, %s139
    $region4: #{tpu_custom_call.1} parent=1 // loop_header_branch
      %23 = sbr.rel (%p21) target = $region8
    $region5: #{tpu_custom_call.1} parent=1 // loop_body
      %s25 = ssub.s32 %s20, 1
      %s26 = ssub.s32 %s20, 2
      %s36 = sadd.s32 1, %s29
      %p37 = scmp.ge.s32.totalorder %s36, 1
      %s38 = scalar_select %p37, 0, %s36
      %s39 = sadd.s32 1, %s28
      %s40 = scalar_select %p37, %s39, %s28
      %p41 = scmp.ge.s32.totalorder %s40, 1
      %s42 = scalar_select %p41, 0, %s40
      %s43 = sadd.s32 1, %s27
      %s44 = scalar_select %p41, %s43, %s27
      %p45 = scmp.ge.s32.totalorder %s44, 2
      %s46 = scalar_select %p45, 0, %s44
      %s47 = ssub.s32 %s27, %s46
      %s48 = ssub.s32 %s29, %s38
      %s49 = sor.u32 %s47, %s48
      %p50 = scmp.eq.s32.totalorder %s49, 0
      %s52 = sadd.s32 %s51, 1
      %s53 = scalar_select %p50, %s51, %s52
      %p56 = pneg %p50
      %p57 = scmp.eq.s32.totalorder %s20, 1
      %p58 = por %p56, %p57
      %p59 = scmp.ne.s32.totalorder %s51, %s54
      %p60 = scmp.eq.s32.totalorder %s20, 0
      %p61 = por %p59, %p60
      %p62 = scmp.ne.s32.totalorder %s51, %s54
      %p63 = scmp.eq.s32.totalorder %s25, 1
      %p64 = por %p62, %p63
      %p65 = scmp.ne.s32.totalorder %s54, %s55
      %p66 = scmp.eq.s32.totalorder %s25, 0
      %p67 = por %p65, %p66
      %p68 = scmp.ne.s32.totalorder %s54, %s55
      %p69 = scmp.eq.s32.totalorder %s26, 1
      %p70 = por %p68, %p69
      %p72 = scmp.ne.s32.totalorder %s55, %s71
      %p73 = scmp.eq.s32.totalorder %s26, 0
      %p74 = por %p72, %p73
      %s75 = ssub.s32 %s29, %s38
      %s76 = ssub.s32 %s28, %s42
      %s77 = sor.u32 %s75, %s76
      %p78 = scmp.eq.s32.totalorder %s77, 0
      %s80 = sadd.s32 %s79, 1
      %s81 = scalar_select %p78, %s79, %s80
      %p84 = pneg %p78
      %p85 = scmp.eq.s32.totalorder %s20, 1
      %p86 = por %p84, %p85
      %p87 = scmp.ne.s32.totalorder %s79, %s82
      %p88 = scmp.eq.s32.totalorder %s20, 0
      %p89 = por %p87, %p88
      %p90 = scmp.ne.s32.totalorder %s79, %s82
      %p91 = scmp.eq.s32.totalorder %s25, 1
      %p92 = por %p90, %p91
      %p93 = scmp.ne.s32.totalorder %s82, %s83
      %p94 = scmp.eq.s32.totalorder %s25, 0
      %p95 = por %p93, %p94
      %p96 = scmp.ne.s32.totalorder %s82, %s83
      %p97 = scmp.eq.s32.totalorder %s26, 1
      %p98 = por %p96, %p97
      %p100 = scmp.ne.s32.totalorder %s83, %s99
      %p101 = scmp.eq.s32.totalorder %s26, 0
      %p102 = por %p100, %p101
      %s103 = ssub.s32 %s27, %s46
      %s104 = ssub.s32 %s28, %s42
      %s105 = sor.u32 %s103, %s104
      %p106 = scmp.eq.s32.totalorder %s105, 0
      %s108 = sadd.s32 %s107, 1
      %s109 = scalar_select %p106, %s107, %s108
      %p112 = pneg %p106
      %p113 = scmp.eq.s32.totalorder %s20, 1
      %p114 = por %p112, %p113
      %p115 = scmp.ne.s32.totalorder %s107, %s110
      %p116 = scmp.eq.s32.totalorder %s20, 0
      %p117 = por %p115, %p116
      %p118 = scmp.ne.s32.totalorder %s107, %s110
      %p119 = scmp.eq.s32.totalorder %s25, 1
      %p120 = por %p118, %p119
      %p121 = scmp.ne.s32.totalorder %s110, %s111
      %p122 = scmp.eq.s32.totalorder %s25, 0
      %p123 = por %p121, %p122
      %p124 = scmp.ne.s32.totalorder %s110, %s111
      %p125 = scmp.eq.s32.totalorder %s26, 1
      %p126 = por %p124, %p125
      %p128 = scmp.ne.s32.totalorder %s111, %s127
      %p129 = scmp.eq.s32.totalorder %s26, 0
      %p130 = por %p128, %p129
      %s131 = ssub.s32 %s27, %s46
      %s132 = ssub.s32 %s28, %s42
      %s133 = sor.u32 %s131, %s132
      %p134 = scmp.eq.s32.totalorder %s133, 0
      %s136 = sadd.s32 %s135, 1
      %s137 = scalar_select %p134, %s135, %s136
      %p140 = pneg %p134
      %p141 = scmp.eq.s32.totalorder %s20, 1
      %p142 = por %p140, %p141
      %p143 = scmp.ne.s32.totalorder %s135, %s138
      %p144 = scmp.eq.s32.totalorder %s20, 0
      %p145 = por %p143, %p144
      %p146 = scmp.ne.s32.totalorder %s135, %s138
      %p147 = scmp.eq.s32.totalorder %s25, 1
      %p148 = por %p146, %p147
      %p149 = scmp.ne.s32.totalorder %s138, %s139
      %p150 = scmp.eq.s32.totalorder %s25, 0
      %p151 = por %p149, %p150
      %p152 = scmp.ne.s32.totalorder %s138, %s139
      %p153 = scmp.eq.s32.totalorder %s26, 1
      %p154 = por %p152, %p153
      %p156 = scmp.ne.s32.totalorder %s139, %s155
      %p157 = scmp.eq.s32.totalorder %s26, 0
      %p158 = por %p156, %p157
      %p159 = scmp.le.s32.totalorder 1, %s20
      %p160 = scmp.lt.s32.totalorder %s20, 3
      %p161 = pnand %p159, %p160
      %p162 = pneg %p161
      // Predicated region
      $region9: #{tpu_custom_call.1} parent=5 // pred_check
        _
      $region10: #{tpu_custom_call.1} parent=5 // pred_check_branch
        %164 = sbr.rel (%p161) target = $region12
      $region11: #{tpu_custom_call.1} parent=5 // pred_region
        %s165 = ssub.s32 %s20, 1
        // Predicated region
        $region13: #{tpu_custom_call.1} parent=11 // pred_check
          %p166 = pneg %p95
        $region14: #{tpu_custom_call.1} parent=11 // pred_check_branch
          %168 = sbr.rel (%p166) target = $region16
        $region15: #{tpu_custom_call.1} parent=11 // pred_region
          %s169 = smul.u32 16, %s32
          %s171 = ssub.s32 2048, 2048
          %172 = vsyncadd [#allocation7], %s171
          %s173 = sadd.s32 %s31, %s169
          %s174 = smul.addr %s173, 128
          %s175 = scalar_lea.hbm %s1, %s174
          %s176 = sshll.u32 [#allocation6], 4
          %s177 = int_to_ptr.vmem [resolvable:$true] %s176
          %182 = dma.hbm_to_vmem [thread:$0]  %s175, 2048, %s177, [#allocation7], 128, 128, 8
        $region16: #{tpu_custom_call.1} parent=11 // pred_fallthru
          _
      $region12: #{tpu_custom_call.1} parent=5 // pred_fallthru
        _
      %p183 = scmp.lt.s32.totalorder %s20, 2
      // Predicated region
      $region17: #{tpu_custom_call.1} parent=5 // pred_check
        %p184 = pneg %p183
      $region18: #{tpu_custom_call.1} parent=5 // pred_check_branch
        %186 = sbr.rel (%p184) target = $region20
      $region19: #{tpu_custom_call.1} parent=5 // pred_region
        // Predicated region
        $region21: #{tpu_custom_call.1} parent=19 // pred_check
          %p187 = pneg %p61
        $region22: #{tpu_custom_call.1} parent=19 // pred_check_branch
          %189 = sbr.rel (%p187) target = $region24
        $region23: #{tpu_custom_call.1} parent=19 // pred_region
          %s190 = sand.u32 %s51, 1
          %s191 = scalar_lea.sflag [#allocation4], %s190
          %s192 = sand.u32 %s51, 1
          %s193 = smul.addr %s192, 256
          %s194 = scalar_lea.vmem [#allocation3], %s193
          %s195 = smul.u32 32, %s27
          %s197 = ssub.s32 4096, 4096
          %198 = vsyncadd %s191, %s197
          %s199 = sadd.s32 %s29, %s195
          %s200 = smul.addr %s199, 128
          %s201 = scalar_lea.hbm %s0, %s200
          %s202 = sshll.u32 %s194, 4
          %s203 = int_to_ptr.vmem [resolvable:$true] %s202
          %208 = dma.hbm_to_vmem [thread:$0]  %s201, 4096, %s203, %s191, 128, 128, 8
        $region24: #{tpu_custom_call.1} parent=19 // pred_fallthru
          _
      $region20: #{tpu_custom_call.1} parent=5 // pred_fallthru
        _
      %p209 = scmp.le.s32.totalorder 1, %s20
      %p210 = scmp.lt.s32.totalorder %s20, 3
      %p211 = pnand %p209, %p210
      %p212 = pneg %p211
      // Predicated region
      $region25: #{tpu_custom_call.1} parent=5 // pred_check
        _
      $region26: #{tpu_custom_call.1} parent=5 // pred_check_branch
        %214 = sbr.rel (%p211) target = $region28
      $region27: #{tpu_custom_call.1} parent=5 // pred_region
        %s215 = ssub.s32 %s20, 1
        %s216 = sand.u32 %s54, 1
        %s217 = scalar_lea.sflag [#allocation4], %s216
        %s218 = sand.u32 %s54, 1
        %s219 = smul.addr %s218, 256
        %s220 = scalar_lea.vmem [#allocation3], %s219
        // Predicated region
        $region29: #{tpu_custom_call.1} parent=27 // pred_check
          %p221 = pneg %p67
        $region30: #{tpu_custom_call.1} parent=27 // pred_check_branch
          %223 = sbr.rel (%p221) target = $region32
        $region31: #{tpu_custom_call.1} parent=27 // pred_region
          %224 = dma.done %s217, 4096
        $region32: #{tpu_custom_call.1} parent=27 // pred_fallthru
          _
        // Predicated region
        $region33: #{tpu_custom_call.1} parent=27 // pred_check
          %p225 = pneg %p95
        $region34: #{tpu_custom_call.1} parent=27 // pred_check_branch
          %227 = sbr.rel (%p225) target = $region36
        $region35: #{tpu_custom_call.1} parent=27 // pred_region
          %228 = dma.done [#allocation7], 2048
        $region36: #{tpu_custom_call.1} parent=27 // pred_fallthru
          _
        %s229 = sand.u32 %s54, 1
        %s230 = scalar_lea.sflag [#allocation4], %s229
        %s231 = sand.u32 %s54, 1
        %s232 = smul.addr %s231, 256
        %s233 = scalar_lea.vmem [#allocation3], %s232
        %p234 = pneg %p67
        %p235 = pneg %p64
        %p236 = pneg %p95
        %p237 = pneg %p92
        %p238 = pneg %p123
        %p239 = pneg %p120
        %s240 = sand.u32 %s110, 1
        %s241 = scalar_lea.sflag [#allocation5], %s240
        %s242 = sand.u32 %s110, 1
        %s243 = smul.addr %s242, 256
        %s244 = scalar_lea.vmem [#allocation8], %s243
        %p245 = pneg %p151
        %p246 = pneg %p148
        %s247 = sand.u32 %s138, 1
        %s248 = scalar_lea.sflag [#allocation10], %s247
        %s249 = sand.u32 %s138, 1
        %s250 = smul.addr %s249, 2
        %s251 = scalar_lea.vmem [#allocation9], %s250
        %s252 = smul.u32 32, %s30
        %s253 = smul.u32 16, %s32
        %s254 = smul.u32 32, %s30
        %p255 = scmp.eq.s32.totalorder %s32, 0
        // Predicated region
        $region37: #{tpu_custom_call.1} parent=27 // pred_check
          %p256 = pneg %p255
        $region38: #{tpu_custom_call.1} parent=27 // pred_check_branch
          %258 = sbr.rel (%p256) target = $region40
        $region39: #{tpu_custom_call.1} parent=27 // pred_region
          %259 = vst [vmem:[#allocation2] sm:$0xff] 0.0
          %260 = vst [vmem:[#allocation2 + $0x8] sm:$0xff] 0.0
          %261 = vst [vmem:[#allocation2 + $0x10] sm:$0xff] 0.0
          %262 = vst [vmem:[#allocation2 + $0x18] sm:$0xff] 0.0
          %263 = vst [vmem:[#allocation2 + $0x20] sm:$0xff] 0.0
          %264 = vst [vmem:[#allocation2 + $0x28] sm:$0xff] 0.0
          %265 = vst [vmem:[#allocation2 + $0x30] sm:$0xff] 0.0
          %266 = vst [vmem:[#allocation2 + $0x38] sm:$0xff] 0.0
          %267 = vst [vmem:[#allocation2 + $0x40] sm:$0xff] 0.0
          %268 = vst [vmem:[#allocation2 + $0x48] sm:$0xff] 0.0
          %269 = vst [vmem:[#allocation2 + $0x50] sm:$0xff] 0.0
          %270 = vst [vmem:[#allocation2 + $0x58] sm:$0xff] 0.0
          %271 = vst [vmem:[#allocation2 + $0x60] sm:$0xff] 0.0
          %272 = vst [vmem:[#allocation2 + $0x68] sm:$0xff] 0.0
          %273 = vst [vmem:[#allocation2 + $0x70] sm:$0xff] 0.0
          %274 = vst [vmem:[#allocation2 + $0x78] sm:$0xff] 0.0
          %275 = vst [vmem:[#allocation2 + $0x80] sm:$0xff] 0.0
          %276 = vst [vmem:[#allocation2 + $0x88] sm:$0xff] 0.0
          %277 = vst [vmem:[#allocation2 + $0x90] sm:$0xff] 0.0
          %278 = vst [vmem:[#allocation2 + $0x98] sm:$0xff] 0.0
          %279 = vst [vmem:[#allocation2 + $0xa0] sm:$0xff] 0.0
          %280 = vst [vmem:[#allocation2 + $0xa8] sm:$0xff] 0.0
          %281 = vst [vmem:[#allocation2 + $0xb0] sm:$0xff] 0.0
          %282 = vst [vmem:[#allocation2 + $0xb8] sm:$0xff] 0.0
          %283 = vst [vmem:[#allocation2 + $0xc0] sm:$0xff] 0.0
          %284 = vst [vmem:[#allocation2 + $0xc8] sm:$0xff] 0.0
          %285 = vst [vmem:[#allocation2 + $0xd0] sm:$0xff] 0.0
          %286 = vst [vmem:[#allocation2 + $0xd8] sm:$0xff] 0.0
          %287 = vst [vmem:[#allocation2 + $0xe0] sm:$0xff] 0.0
          %288 = vst [vmem:[#allocation2 + $0xe8] sm:$0xff] 0.0
          %289 = vst [vmem:[#allocation2 + $0xf0] sm:$0xff] 0.0
          %290 = vst [vmem:[#allocation2 + $0xf8] sm:$0xff] 0.0
        $region40: #{tpu_custom_call.1} parent=27 // pred_fallthru
          _
        %v291 = vld [vmem:[#allocation2] sm:$0xff]
        %v292 = vld [vmem:[#allocation2 + $0x8] sm:$0xff]
        %v293 = vld [vmem:[#allocation2 + $0x10] sm:$0xff]
        %v294 = vld [vmem:[#allocation2 + $0x18] sm:$0xff]
        %v295 = vld [vmem:[#allocation2 + $0x20] sm:$0xff]
        %v296 = vld [vmem:[#allocation2 + $0x28] sm:$0xff]
        %v297 = vld [vmem:[#allocation2 + $0x30] sm:$0xff]
        %v298 = vld [vmem:[#allocation2 + $0x38] sm:$0xff]
        %v299 = vld [vmem:[#allocation2 + $0x40] sm:$0xff]
        %v300 = vld [vmem:[#allocation2 + $0x48] sm:$0xff]
        %v301 = vld [vmem:[#allocation2 + $0x50] sm:$0xff]
        %v302 = vld [vmem:[#allocation2 + $0x58] sm:$0xff]
        %v303 = vld [vmem:[#allocation2 + $0x60] sm:$0xff]
        %v304 = vld [vmem:[#allocation2 + $0x68] sm:$0xff]
        %v305 = vld [vmem:[#allocation2 + $0x70] sm:$0xff]
        %v306 = vld [vmem:[#allocation2 + $0x78] sm:$0xff]
        %v307 = vld [vmem:[#allocation2 + $0x80] sm:$0xff]
        %v308 = vld [vmem:[#allocation2 + $0x88] sm:$0xff]
        %v309 = vld [vmem:[#allocation2 + $0x90] sm:$0xff]
        %v310 = vld [vmem:[#allocation2 + $0x98] sm:$0xff]
        %v311 = vld [vmem:[#allocation2 + $0xa0] sm:$0xff]
        %v312 = vld [vmem:[#allocation2 + $0xa8] sm:$0xff]
        %v313 = vld [vmem:[#allocation2 + $0xb0] sm:$0xff]
        %v314 = vld [vmem:[#allocation2 + $0xb8] sm:$0xff]
        %v315 = vld [vmem:[#allocation2 + $0xc0] sm:$0xff]
        %v316 = vld [vmem:[#allocation2 + $0xc8] sm:$0xff]
        %v317 = vld [vmem:[#allocation2 + $0xd0] sm:$0xff]
        %v318 = vld [vmem:[#allocation2 + $0xd8] sm:$0xff]
        %v319 = vld [vmem:[#allocation2 + $0xe0] sm:$0xff]
        %v320 = vld [vmem:[#allocation2 + $0xe8] sm:$0xff]
        %v321 = vld [vmem:[#allocation2 + $0xf0] sm:$0xff]
        %v322 = vld [vmem:[#allocation2 + $0xf8] sm:$0xff]
        %v323 = vld [vmem:[%s220] sm:$0xff]
        %v324 = vld [vmem:[%s220 + $0x8] sm:$0xff]
        %v325 = vld [vmem:[%s220 + $0x10] sm:$0xff]
        %v326 = vld [vmem:[%s220 + $0x18] sm:$0xff]
        %v327 = vld [vmem:[%s220 + $0x20] sm:$0xff]
        %v328 = vld [vmem:[%s220 + $0x28] sm:$0xff]
        %v329 = vld [vmem:[%s220 + $0x30] sm:$0xff]
        %v330 = vld [vmem:[%s220 + $0x38] sm:$0xff]
        %v331 = vld [vmem:[%s220 + $0x40] sm:$0xff]
        %v332 = vld [vmem:[%s220 + $0x48] sm:$0xff]
        %v333 = vld [vmem:[%s220 + $0x50] sm:$0xff]
        %v334 = vld [vmem:[%s220 + $0x58] sm:$0xff]
        %v335 = vld [vmem:[%s220 + $0x60] sm:$0xff]
        %v336 = vld [vmem:[%s220 + $0x68] sm:$0xff]
        %v337 = vld [vmem:[%s220 + $0x70] sm:$0xff]
        %v338 = vld [vmem:[%s220 + $0x78] sm:$0xff]
        %v339 = vld [vmem:[%s220 + $0x80] sm:$0xff]
        %v340 = vld [vmem:[%s220 + $0x88] sm:$0xff]
        %v341 = vld [vmem:[%s220 + $0x90] sm:$0xff]
        %v342 = vld [vmem:[%s220 + $0x98] sm:$0xff]
        %v343 = vld [vmem:[%s220 + $0xa0] sm:$0xff]
        %v344 = vld [vmem:[%s220 + $0xa8] sm:$0xff]
        %v345 = vld [vmem:[%s220 + $0xb0] sm:$0xff]
        %v346 = vld [vmem:[%s220 + $0xb8] sm:$0xff]
        %v347 = vld [vmem:[%s220 + $0xc0] sm:$0xff]
        %v348 = vld [vmem:[%s220 + $0xc8] sm:$0xff]
        %v349 = vld [vmem:[%s220 + $0xd0] sm:$0xff]
        %v350 = vld [vmem:[%s220 + $0xd8] sm:$0xff]
        %v351 = vld [vmem:[%s220 + $0xe0] sm:$0xff]
        %v352 = vld [vmem:[%s220 + $0xe8] sm:$0xff]
        %v353 = vld [vmem:[%s220 + $0xf0] sm:$0xff]
        %v354 = vld [vmem:[%s220 + $0xf8] sm:$0xff]
        %v355 = vld [vmem:[#allocation6] sm:$0xff]
        %v356 = vld [vmem:[#allocation6 + $0x8] sm:$0xff]
        %v357 = vld [vmem:[#allocation6 + $0x10] sm:$0xff]
        %v358 = vld [vmem:[#allocation6 + $0x18] sm:$0xff]
        %v359 = vld [vmem:[#allocation6 + $0x20] sm:$0xff]
        %v360 = vld [vmem:[#allocation6 + $0x28] sm:$0xff]
        %v361 = vld [vmem:[#allocation6 + $0x30] sm:$0xff]
        %v362 = vld [vmem:[#allocation6 + $0x38] sm:$0xff]
        %v363 = vld [vmem:[#allocation6 + $0x40] sm:$0xff]
        %v364 = vld [vmem:[#allocation6 + $0x48] sm:$0xff]
        %v365 = vld [vmem:[#allocation6 + $0x50] sm:$0xff]
        %v366 = vld [vmem:[#allocation6 + $0x58] sm:$0xff]
        %v367 = vld [vmem:[#allocation6 + $0x60] sm:$0xff]
        %v368 = vld [vmem:[#allocation6 + $0x68] sm:$0xff]
        %v369 = vld [vmem:[#allocation6 + $0x70] sm:$0xff]
        %v370 = vld [vmem:[#allocation6 + $0x78] sm:$0xff]
        %371 = vmatprep.subr.mxu0 0.0
        %372 = vmatpush1.msra.mxu0 %v355
        %373 = vmatprep.subr.mxu0 0.0
        %374 = vmatpush1.msra.mxu0 %v356
        %375 = vmatprep.subr.mxu0 0.0
        %376 = vmatpush1.msra.mxu0 %v357
        %377 = vmatprep.subr.mxu0 0.0
        %378 = vmatpush1.msra.mxu0 %v358
        %379 = vmatprep.subr.mxu0 0.0
        %380 = vmatpush1.msra.mxu0 %v359
        %381 = vmatprep.subr.mxu0 0.0
        %382 = vmatpush1.msra.mxu0 %v360
        %383 = vmatprep.subr.mxu0 0.0
        %384 = vmatpush1.msra.mxu0 %v361
        %385 = vmatprep.subr.mxu0 0.0
        %386 = vmatpush1.msra.mxu0 %v362
        %387 = vmatprep.subr.mxu0 0.0
        %388 = vmatpush1.msra.mxu0 %v363
        %389 = vmatprep.subr.mxu0 0.0
        %390 = vmatpush1.msra.mxu0 %v364
        %391 = vmatprep.subr.mxu0 0.0
        %392 = vmatpush1.msra.mxu0 %v365
        %393 = vmatprep.subr.mxu0 0.0
        %394 = vmatpush1.msra.mxu0 %v366
        %395 = vmatprep.subr.mxu0 0.0
        %396 = vmatpush1.msra.mxu0 %v367
        %397 = vmatprep.subr.mxu0 0.0
        %398 = vmatpush1.msra.mxu0 %v368
        %399 = vmatprep.subr.mxu0 0.0
        %400 = vmatpush1.msra.mxu0 %v369
        %401 = vmatprep.subr.mxu0 0.0
        %402 = vmatpush1.msra.mxu0 %v370
        %403 = vmatprep.subr.mxu0 0.0
        %404 = vmatpush1.msra.mxu0 0.0
        %405 = vmatprep.subr.mxu0 0.0
        %406 = vmatpush1.msra.mxu0 0.0
        %407 = vmatprep.subr.mxu0 0.0
        %408 = vmatpush1.msra.mxu0 0.0
        %409 = vmatprep.subr.mxu0 0.0
        %410 = vmatpush1.msra.mxu0 0.0
        %411 = vmatprep.subr.mxu0 0.0
        %412 = vmatpush1.msra.mxu0 0.0
        %413 = vmatprep.subr.mxu0 0.0
        %414 = vmatpush1.msra.mxu0 0.0
        %415 = vmatprep.subr.mxu0 0.0
        %416 = vmatpush1.msra.mxu0 0.0
        %417 = vmatprep.subr.mxu0 0.0
        %418 = vmatpush1.msra.mxu0 0.0
        %419 = vmatprep.subr.mxu0 0.0
        %420 = vmatpush1.msra.mxu0 0.0
        %421 = vmatprep.subr.mxu0 0.0
        %422 = vmatpush1.msra.mxu0 0.0
        %423 = vmatprep.subr.mxu0 0.0
        %424 = vmatpush1.msra.mxu0 0.0
        %425 = vmatprep.subr.mxu0 0.0
        %426 = vmatpush1.msra.mxu0 0.0
        %427 = vmatprep.subr.mxu0 0.0
        %428 = vmatpush1.msra.mxu0 0.0
        %429 = vmatprep.subr.mxu0 0.0
        %430 = vmatpush1.msra.mxu0 0.0
        %431 = vmatprep.subr.mxu0 0.0
        %432 = vmatpush1.msra.mxu0 0.0
        %433 = vmatprep.subr.mxu0 0.0
        %434 = vmatpush1.msra.mxu0 0.0
        %435 = vmatprep.mubr.f32.mxu0 0.0
        %436 = vmatmul.mubr.f32.gmra.mrb[0].mxu0 %v323
        %v437 = vpop.f32.mrb[0].mxu0
        %v438 = vadd.f32 0.0, %v437
        %v439 = vpop.f32.mrb[0].mxu0
        %440 = vmatprep.mubr.f32.mxu0 0.0
        %441 = vmatmul.mubr.f32.gmra.mrb[0].mxu0 %v324
        %v442 = vpop.f32.mrb[0].mxu0
        %v443 = vadd.f32 0.0, %v442
        %v444 = vpop.f32.mrb[0].mxu0
        %445 = vmatprep.mubr.f32.mxu0 0.0
        %446 = vmatmul.mubr.f32.gmra.mrb[0].mxu0 %v325
        %v447 = vpop.f32.mrb[0].mxu0
        %v448 = vadd.f32 0.0, %v447
        %v449 = vpop.f32.mrb[0].mxu0
        %450 = vmatprep.mubr.f32.mxu0 0.0
        %451 = vmatmul.mubr.f32.gmra.mrb[0].mxu0 %v326
        %v452 = vpop.f32.mrb[0].mxu0
        %v453 = vadd.f32 0.0, %v452
        %v454 = vpop.f32.mrb[0].mxu0
        %455 = vmatprep.mubr.f32.mxu0 0.0
        %456 = vmatmul.mubr.f32.gmra.mrb[0].mxu0 %v327
        %v457 = vpop.f32.mrb[0].mxu0
        %v458 = vadd.f32 0.0, %v457
        %v459 = vpop.f32.mrb[0].mxu0
        %460 = vmatprep.mubr.f32.mxu0 0.0
        %461 = vmatmul.mubr.f32.gmra.mrb[0].mxu0 %v328
        %v462 = vpop.f32.mrb[0].mxu0
        %v463 = vadd.f32 0.0, %v462
        %v464 = vpop.f32.mrb[0].mxu0
        %465 = vmatprep.mubr.f32.mxu0 0.0
        %466 = vmatmul.mubr.f32.gmra.mrb[0].mxu0 %v329
        %v467 = vpop.f32.mrb[0].mxu0
        %v468 = vadd.f32 0.0, %v467
        %v469 = vpop.f32.mrb[0].mxu0
        %470 = vmatprep.mubr.f32.mxu0 0.0
        %471 = vmatmul.mubr.f32.gmra.mrb[0].mxu0 %v330
        %v472 = vpop.f32.mrb[0].mxu0
        %v473 = vadd.f32 0.0, %v472
        %v474 = vpop.f32.mrb[0].mxu0
        %475 = vmatprep.mubr.f32.mxu0 0.0
        %476 = vmatmul.mubr.f32.gmra.mrb[0].mxu0 %v331
        %v477 = vpop.f32.mrb[0].mxu0
        %v478 = vadd.f32 0.0, %v477
        %v479 = vpop.f32.mrb[0].mxu0
        %480 = vmatprep.mubr.f32.mxu0 0.0
        %481 = vmatmul.mubr.f32.gmra.mrb[0].mxu0 %v332
        %v482 = vpop.f32.mrb[0].mxu0
        %v483 = vadd.f32 0.0, %v482
        %v484 = vpop.f32.mrb[0].mxu0
        %485 = vmatprep.mubr.f32.mxu0 0.0
        %486 = vmatmul.mubr.f32.gmra.mrb[0].mxu0 %v333
        %v487 = vpop.f32.mrb[0].mxu0
        %v488 = vadd.f32 0.0, %v487
        %v489 = vpop.f32.mrb[0].mxu0
        %490 = vmatprep.mubr.f32.mxu0 0.0
        %491 = vmatmul.mubr.f32.gmra.mrb[0].mxu0 %v334
        %v492 = vpop.f32.mrb[0].mxu0
        %v493 = vadd.f32 0.0, %v492
        %v494 = vpop.f32.mrb[0].mxu0
        %495 = vmatprep.mubr.f32.mxu0 0.0
        %496 = vmatmul.mubr.f32.gmra.mrb[0].mxu0 %v335
        %v497 = vpop.f32.mrb[0].mxu0
        %v498 = vadd.f32 0.0, %v497
        %v499 = vpop.f32.mrb[0].mxu0
        %500 = vmatprep.mubr.f32.mxu0 0.0
        %501 = vmatmul.mubr.f32.gmra.mrb[0].mxu0 %v336
        %v502 = vpop.f32.mrb[0].mxu0
        %v503 = vadd.f32 0.0, %v502
        %v504 = vpop.f32.mrb[0].mxu0
        %505 = vmatprep.mubr.f32.mxu0 0.0
        %506 = vmatmul.mubr.f32.gmra.mrb[0].mxu0 %v337
        %v507 = vpop.f32.mrb[0].mxu0
        %v508 = vadd.f32 0.0, %v507
        %v509 = vpop.f32.mrb[0].mxu0
        %510 = vmatprep.mubr.f32.mxu0 0.0
        %511 = vmatmul.mubr.f32.gmra.mrb[0].mxu0 %v338
        %v512 = vpop.f32.mrb[0].mxu0
        %v513 = vadd.f32 0.0, %v512
        %v514 = vpop.f32.mrb[0].mxu0
        %515 = vmatprep.mubr.f32.mxu0 0.0
        %516 = vmatmul.mubr.f32.gmra.mrb[0].mxu0 %v339
        %v517 = vpop.f32.mrb[0].mxu0
        %v518 = vadd.f32 0.0, %v517
        %v519 = vpop.f32.mrb[0].mxu0
        %520 = vmatprep.mubr.f32.mxu0 0.0
        %521 = vmatmul.mubr.f32.gmra.mrb[0].mxu0 %v340
        %v522 = vpop.f32.mrb[0].mxu0
        %v523 = vadd.f32 0.0, %v522
        %v524 = vpop.f32.mrb[0].mxu0
        %525 = vmatprep.mubr.f32.mxu0 0.0
        %526 = vmatmul.mubr.f32.gmra.mrb[0].mxu0 %v341
        %v527 = vpop.f32.mrb[0].mxu0
        %v528 = vadd.f32 0.0, %v527
        %v529 = vpop.f32.mrb[0].mxu0
        %530 = vmatprep.mubr.f32.mxu0 0.0
        %531 = vmatmul.mubr.f32.gmra.mrb[0].mxu0 %v342
        %v532 = vpop.f32.mrb[0].mxu0
        %v533 = vadd.f32 0.0, %v532
        %v534 = vpop.f32.mrb[0].mxu0
        %535 = vmatprep.mubr.f32.mxu0 0.0
        %536 = vmatmul.mubr.f32.gmra.mrb[0].mxu0 %v343
        %v537 = vpop.f32.mrb[0].mxu0
        %v538 = vadd.f32 0.0, %v537
        %v539 = vpop.f32.mrb[0].mxu0
        %540 = vmatprep.mubr.f32.mxu0 0.0
        %541 = vmatmul.mubr.f32.gmra.mrb[0].mxu0 %v344
        %v542 = vpop.f32.mrb[0].mxu0
        %v543 = vadd.f32 0.0, %v542
        %v544 = vpop.f32.mrb[0].mxu0
        %545 = vmatprep.mubr.f32.mxu0 0.0
        %546 = vmatmul.mubr.f32.gmra.mrb[0].mxu0 %v345
        %v547 = vpop.f32.mrb[0].mxu0
        %v548 = vadd.f32 0.0, %v547
        %v549 = vpop.f32.mrb[0].mxu0
        %550 = vmatprep.mubr.f32.mxu0 0.0
        %551 = vmatmul.mubr.f32.gmra.mrb[0].mxu0 %v346
        %v552 = vpop.f32.mrb[0].mxu0
        %v553 = vadd.f32 0.0, %v552
        %v554 = vpop.f32.mrb[0].mxu0
        %555 = vmatprep.mubr.f32.mxu0 0.0
        %556 = vmatmul.mubr.f32.gmra.mrb[0].mxu0 %v347
        %v557 = vpop.f32.mrb[0].mxu0
        %v558 = vadd.f32 0.0, %v557
        %v559 = vpop.f32.mrb[0].mxu0
        %560 = vmatprep.mubr.f32.mxu0 0.0
        %561 = vmatmul.mubr.f32.gmra.mrb[0].mxu0 %v348
        %v562 = vpop.f32.mrb[0].mxu0
        %v563 = vadd.f32 0.0, %v562
        %v564 = vpop.f32.mrb[0].mxu0
        %565 = vmatprep.mubr.f32.mxu0 0.0
        %566 = vmatmul.mubr.f32.gmra.mrb[0].mxu0 %v349
        %v567 = vpop.f32.mrb[0].mxu0
        %v568 = vadd.f32 0.0, %v567
        %v569 = vpop.f32.mrb[0].mxu0
        %570 = vmatprep.mubr.f32.mxu0 0.0
        %571 = vmatmul.mubr.f32.gmra.mrb[0].mxu0 %v350
        %v572 = vpop.f32.mrb[0].mxu0
        %v573 = vadd.f32 0.0, %v572
        %v574 = vpop.f32.mrb[0].mxu0
        %575 = vmatprep.mubr.f32.mxu0 0.0
        %576 = vmatmul.mubr.f32.gmra.mrb[0].mxu0 %v351
        %v577 = vpop.f32.mrb[0].mxu0
        %v578 = vadd.f32 0.0, %v577
        %v579 = vpop.f32.mrb[0].mxu0
        %580 = vmatprep.mubr.f32.mxu0 0.0
        %581 = vmatmul.mubr.f32.gmra.mrb[0].mxu0 %v352
        %v582 = vpop.f32.mrb[0].mxu0
        %v583 = vadd.f32 0.0, %v582
        %v584 = vpop.f32.mrb[0].mxu0
        %585 = vmatprep.mubr.f32.mxu0 0.0
        %586 = vmatmul.mubr.f32.gmra.mrb[0].mxu0 %v353
        %v587 = vpop.f32.mrb[0].mxu0
        %v588 = vadd.f32 0.0, %v587
        %v589 = vpop.f32.mrb[0].mxu0
        %590 = vmatprep.mubr.f32.mxu0 0.0
        %591 = vmatmul.mubr.f32.gmra.mrb[0].mxu0 %v354
        %v592 = vpop.f32.mrb[0].mxu0
        %v593 = vadd.f32 0.0, %v592
        %v594 = vpop.f32.mrb[0].mxu0
        %595 = vdwg.mxu0
        %v596 = vadd.f32 %v291, %v438
        %v597 = vadd.f32 %v292, %v443
        %v598 = vadd.f32 %v293, %v448
        %v599 = vadd.f32 %v294, %v453
        %v600 = vadd.f32 %v295, %v458
        %v601 = vadd.f32 %v296, %v463
        %v602 = vadd.f32 %v297, %v468
        %v603 = vadd.f32 %v298, %v473
        %v604 = vadd.f32 %v299, %v478
        %v605 = vadd.f32 %v300, %v483
        %v606 = vadd.f32 %v301, %v488
        %v607 = vadd.f32 %v302, %v493
        %v608 = vadd.f32 %v303, %v498
        %v609 = vadd.f32 %v304, %v503
        %v610 = vadd.f32 %v305, %v508
        %v611 = vadd.f32 %v306, %v513
        %v612 = vadd.f32 %v307, %v518
        %v613 = vadd.f32 %v308, %v523
        %v614 = vadd.f32 %v309, %v528
        %v615 = vadd.f32 %v310, %v533
        %v616 = vadd.f32 %v311, %v538
        %v617 = vadd.f32 %v312, %v543
        %v618 = vadd.f32 %v313, %v548
        %v619 = vadd.f32 %v314, %v553
        %v620 = vadd.f32 %v315, %v558
        %v621 = vadd.f32 %v316, %v563
        %v622 = vadd.f32 %v317, %v568
        %v623 = vadd.f32 %v318, %v573
        %v624 = vadd.f32 %v319, %v578
        %v625 = vadd.f32 %v320, %v583
        %v626 = vadd.f32 %v321, %v588
        %v627 = vadd.f32 %v322, %v593
        %628 = vst [vmem:[#allocation2] sm:$0xff] %v596
        %629 = vst [vmem:[#allocation2 + $0x8] sm:$0xff] %v597
        %630 = vst [vmem:[#allocation2 + $0x10] sm:$0xff] %v598
        %631 = vst [vmem:[#allocation2 + $0x18] sm:$0xff] %v599
        %632 = vst [vmem:[#allocation2 + $0x20] sm:$0xff] %v600
        %633 = vst [vmem:[#allocation2 + $0x28] sm:$0xff] %v601
        %634 = vst [vmem:[#allocation2 + $0x30] sm:$0xff] %v602
        %635 = vst [vmem:[#allocation2 + $0x38] sm:$0xff] %v603
        %636 = vst [vmem:[#allocation2 + $0x40] sm:$0xff] %v604
        %637 = vst [vmem:[#allocation2 + $0x48] sm:$0xff] %v605
        %638 = vst [vmem:[#allocation2 + $0x50] sm:$0xff] %v606
        %639 = vst [vmem:[#allocation2 + $0x58] sm:$0xff] %v607
        %640 = vst [vmem:[#allocation2 + $0x60] sm:$0xff] %v608
        %641 = vst [vmem:[#allocation2 + $0x68] sm:$0xff] %v609
        %642 = vst [vmem:[#allocation2 + $0x70] sm:$0xff] %v610
        %643 = vst [vmem:[#allocation2 + $0x78] sm:$0xff] %v611
        %644 = vst [vmem:[#allocation2 + $0x80] sm:$0xff] %v612
        %645 = vst [vmem:[#allocation2 + $0x88] sm:$0xff] %v613
        %646 = vst [vmem:[#allocation2 + $0x90] sm:$0xff] %v614
        %647 = vst [vmem:[#allocation2 + $0x98] sm:$0xff] %v615
        %648 = vst [vmem:[#allocation2 + $0xa0] sm:$0xff] %v616
        %649 = vst [vmem:[#allocation2 + $0xa8] sm:$0xff] %v617
        %650 = vst [vmem:[#allocation2 + $0xb0] sm:$0xff] %v618
        %651 = vst [vmem:[#allocation2 + $0xb8] sm:$0xff] %v619
        %652 = vst [vmem:[#allocation2 + $0xc0] sm:$0xff] %v620
        %653 = vst [vmem:[#allocation2 + $0xc8] sm:$0xff] %v621
        %654 = vst [vmem:[#allocation2 + $0xd0] sm:$0xff] %v622
        %655 = vst [vmem:[#allocation2 + $0xd8] sm:$0xff] %v623
        %656 = vst [vmem:[#allocation2 + $0xe0] sm:$0xff] %v624
        %657 = vst [vmem:[#allocation2 + $0xe8] sm:$0xff] %v625
        %658 = vst [vmem:[#allocation2 + $0xf0] sm:$0xff] %v626
        %659 = vst [vmem:[#allocation2 + $0xf8] sm:$0xff] %v627
        // Predicated region
        $region41: #{tpu_custom_call.1} parent=27 // pred_check
          %p660 = pneg %p255
        $region42: #{tpu_custom_call.1} parent=27 // pred_check_branch
          %662 = sbr.rel (%p660) target = $region44
        $region43: #{tpu_custom_call.1} parent=27 // pred_region
          %v663 = vld [vmem:[#allocation2] sm:$0xff]
          %v664 = vld [vmem:[#allocation2 + $0x8] sm:$0xff]
          %v665 = vld [vmem:[#allocation2 + $0x10] sm:$0xff]
          %v666 = vld [vmem:[#allocation2 + $0x18] sm:$0xff]
          %v667 = vld [vmem:[#allocation2 + $0x20] sm:$0xff]
          %v668 = vld [vmem:[#allocation2 + $0x28] sm:$0xff]
          %v669 = vld [vmem:[#allocation2 + $0x30] sm:$0xff]
          %v670 = vld [vmem:[#allocation2 + $0x38] sm:$0xff]
          %v671 = vld [vmem:[#allocation2 + $0x40] sm:$0xff]
          %v672 = vld [vmem:[#allocation2 + $0x48] sm:$0xff]
          %v673 = vld [vmem:[#allocation2 + $0x50] sm:$0xff]
          %v674 = vld [vmem:[#allocation2 + $0x58] sm:$0xff]
          %v675 = vld [vmem:[#allocation2 + $0x60] sm:$0xff]
          %v676 = vld [vmem:[#allocation2 + $0x68] sm:$0xff]
          %v677 = vld [vmem:[#allocation2 + $0x70] sm:$0xff]
          %v678 = vld [vmem:[#allocation2 + $0x78] sm:$0xff]
          %v679 = vld [vmem:[#allocation2 + $0x80] sm:$0xff]
          %v680 = vld [vmem:[#allocation2 + $0x88] sm:$0xff]
          %v681 = vld [vmem:[#allocation2 + $0x90] sm:$0xff]
          %v682 = vld [vmem:[#allocation2 + $0x98] sm:$0xff]
          %v683 = vld [vmem:[#allocation2 + $0xa0] sm:$0xff]
          %v684 = vld [vmem:[#allocation2 + $0xa8] sm:$0xff]
          %v685 = vld [vmem:[#allocation2 + $0xb0] sm:$0xff]
          %v686 = vld [vmem:[#allocation2 + $0xb8] sm:$0xff]
          %v687 = vld [vmem:[#allocation2 + $0xc0] sm:$0xff]
          %v688 = vld [vmem:[#allocation2 + $0xc8] sm:$0xff]
          %v689 = vld [vmem:[#allocation2 + $0xd0] sm:$0xff]
          %v690 = vld [vmem:[#allocation2 + $0xd8] sm:$0xff]
          %v691 = vld [vmem:[#allocation2 + $0xe0] sm:$0xff]
          %v692 = vld [vmem:[#allocation2 + $0xe8] sm:$0xff]
          %v693 = vld [vmem:[#allocation2 + $0xf0] sm:$0xff]
          %v694 = vld [vmem:[#allocation2 + $0xf8] sm:$0xff]
          %695 = vst [vmem:[%s244] sm:$0xff] %v663
          %696 = vst [vmem:[%s244 + $0x8] sm:$0xff] %v664
          %697 = vst [vmem:[%s244 + $0x10] sm:$0xff] %v665
          %698 = vst [vmem:[%s244 + $0x18] sm:$0xff] %v666
          %699 = vst [vmem:[%s244 + $0x20] sm:$0xff] %v667
          %700 = vst [vmem:[%s244 + $0x28] sm:$0xff] %v668
          %701 = vst [vmem:[%s244 + $0x30] sm:$0xff] %v669
          %702 = vst [vmem:[%s244 + $0x38] sm:$0xff] %v670
          %703 = vst [vmem:[%s244 + $0x40] sm:$0xff] %v671
          %704 = vst [vmem:[%s244 + $0x48] sm:$0xff] %v672
          %705 = vst [vmem:[%s244 + $0x50] sm:$0xff] %v673
          %706 = vst [vmem:[%s244 + $0x58] sm:$0xff] %v674
          %707 = vst [vmem:[%s244 + $0x60] sm:$0xff] %v675
          %708 = vst [vmem:[%s244 + $0x68] sm:$0xff] %v676
          %709 = vst [vmem:[%s244 + $0x70] sm:$0xff] %v677
          %710 = vst [vmem:[%s244 + $0x78] sm:$0xff] %v678
          %711 = vst [vmem:[%s244 + $0x80] sm:$0xff] %v679
          %712 = vst [vmem:[%s244 + $0x88] sm:$0xff] %v680
          %713 = vst [vmem:[%s244 + $0x90] sm:$0xff] %v681
          %714 = vst [vmem:[%s244 + $0x98] sm:$0xff] %v682
          %715 = vst [vmem:[%s244 + $0xa0] sm:$0xff] %v683
          %716 = vst [vmem:[%s244 + $0xa8] sm:$0xff] %v684
          %717 = vst [vmem:[%s244 + $0xb0] sm:$0xff] %v685
          %718 = vst [vmem:[%s244 + $0xb8] sm:$0xff] %v686
          %719 = vst [vmem:[%s244 + $0xc0] sm:$0xff] %v687
          %720 = vst [vmem:[%s244 + $0xc8] sm:$0xff] %v688
          %721 = vst [vmem:[%s244 + $0xd0] sm:$0xff] %v689
          %722 = vst [vmem:[%s244 + $0xd8] sm:$0xff] %v690
          %723 = vst [vmem:[%s244 + $0xe0] sm:$0xff] %v691
          %724 = vst [vmem:[%s244 + $0xe8] sm:$0xff] %v692
          %725 = vst [vmem:[%s244 + $0xf0] sm:$0xff] %v693
          %726 = vst [vmem:[%s244 + $0xf8] sm:$0xff] %v694
          %v727 = vadd.f32 %v663, %v664
          %v728 = vadd.f32 %v727, %v665
          %v729 = vadd.f32 %v728, %v666
          %v730 = vadd.f32 %v729, %v667
          %v731 = vadd.f32 %v730, %v668
          %v732 = vadd.f32 %v731, %v669
          %v733 = vadd.f32 %v732, %v670
          %v734 = vadd.f32 %v733, %v671
          %v735 = vadd.f32 %v734, %v672
          %v736 = vadd.f32 %v735, %v673
          %v737 = vadd.f32 %v736, %v674
          %v738 = vadd.f32 %v737, %v675
          %v739 = vadd.f32 %v738, %v676
          %v740 = vadd.f32 %v739, %v677
          %v741 = vadd.f32 %v740, %v678
          %v742 = vadd.f32 %v741, %v679
          %v743 = vadd.f32 %v742, %v680
          %v744 = vadd.f32 %v743, %v681
          %v745 = vadd.f32 %v744, %v682
          %v746 = vadd.f32 %v745, %v683
          %v747 = vadd.f32 %v746, %v684
          %v748 = vadd.f32 %v747, %v685
          %v749 = vadd.f32 %v748, %v686
          %v750 = vadd.f32 %v749, %v687
          %v751 = vadd.f32 %v750, %v688
          %v752 = vadd.f32 %v751, %v689
          %v753 = vadd.f32 %v752, %v690
          %v754 = vadd.f32 %v753, %v691
          %v755 = vadd.f32 %v754, %v692
          %v756 = vadd.f32 %v755, %v693
          %v757 = vadd.f32 %v756, %v694
          %v758 = vrot.slane %v757, 4
          %v759 = vadd.f32 %v757, %v758
          %v760 = vrot.slane %v759, 2
          %v761 = vadd.f32 %v759, %v760
          %v762 = vrot.slane %v761, 1
          %v763 = vadd.f32 %v761, %v762
          %v764 = vmul.f32 %v663, %v663
          %v765 = vmul.f32 %v664, %v664
          %v766 = vmul.f32 %v665, %v665
          %v767 = vmul.f32 %v666, %v666
          %v768 = vmul.f32 %v667, %v667
          %v769 = vmul.f32 %v668, %v668
          %v770 = vmul.f32 %v669, %v669
          %v771 = vmul.f32 %v670, %v670
          %v772 = vmul.f32 %v671, %v671
          %v773 = vmul.f32 %v672, %v672
          %v774 = vmul.f32 %v673, %v673
          %v775 = vmul.f32 %v674, %v674
          %v776 = vmul.f32 %v675, %v675
          %v777 = vmul.f32 %v676, %v676
          %v778 = vmul.f32 %v677, %v677
          %v779 = vmul.f32 %v678, %v678
          %v780 = vmul.f32 %v679, %v679
          %v781 = vmul.f32 %v680, %v680
          %v782 = vmul.f32 %v681, %v681
          %v783 = vmul.f32 %v682, %v682
          %v784 = vmul.f32 %v683, %v683
          %v785 = vmul.f32 %v684, %v684
          %v786 = vmul.f32 %v685, %v685
          %v787 = vmul.f32 %v686, %v686
          %v788 = vmul.f32 %v687, %v687
          %v789 = vmul.f32 %v688, %v688
          %v790 = vmul.f32 %v689, %v689
          %v791 = vmul.f32 %v690, %v690
          %v792 = vmul.f32 %v691, %v691
          %v793 = vmul.f32 %v692, %v692
          %v794 = vmul.f32 %v693, %v693
          %v795 = vmul.f32 %v694, %v694
          %v796 = vadd.f32 %v764, %v765
          %v797 = vadd.f32 %v796, %v766
          %v798 = vadd.f32 %v797, %v767
          %v799 = vadd.f32 %v798, %v768
          %v800 = vadd.f32 %v799, %v769
          %v801 = vadd.f32 %v800, %v770
          %v802 = vadd.f32 %v801, %v771
          %v803 = vadd.f32 %v802, %v772
          %v804 = vadd.f32 %v803, %v773
          %v805 = vadd.f32 %v804, %v774
          %v806 = vadd.f32 %v805, %v775
          %v807 = vadd.f32 %v806, %v776
          %v808 = vadd.f32 %v807, %v777
          %v809 = vadd.f32 %v808, %v778
          %v810 = vadd.f32 %v809, %v779
          %v811 = vadd.f32 %v810, %v780
          %v812 = vadd.f32 %v811, %v781
          %v813 = vadd.f32 %v812, %v782
          %v814 = vadd.f32 %v813, %v783
          %v815 = vadd.f32 %v814, %v784
          %v816 = vadd.f32 %v815, %v785
          %v817 = vadd.f32 %v816, %v786
          %v818 = vadd.f32 %v817, %v787
          %v819 = vadd.f32 %v818, %v788
          %v820 = vadd.f32 %v819, %v789
          %v821 = vadd.f32 %v820, %v790
          %v822 = vadd.f32 %v821, %v791
          %v823 = vadd.f32 %v822, %v792
          %v824 = vadd.f32 %v823, %v793
          %v825 = vadd.f32 %v824, %v794
          %v826 = vadd.f32 %v825, %v795
          %v827 = vrot.slane %v826, 4
          %v828 = vadd.f32 %v826, %v827
          %v829 = vrot.slane %v828, 2
          %v830 = vadd.f32 %v828, %v829
          %v831 = vrot.slane %v830, 1
          %v832 = vadd.f32 %v830, %v831
          %vm833 = vcmask 1040384
          %v834 = vsel %vm833, %v763, %v832
          %835 = vst [vmem:[%s251] sm:$0x3] %v834
        $region44: #{tpu_custom_call.1} parent=27 // pred_fallthru
          _
        %s836 = sand.u32 %s110, 1
        %s837 = scalar_lea.sflag [#allocation5], %s836
        %s838 = sand.u32 %s110, 1
        %s839 = smul.addr %s838, 256
        %s840 = scalar_lea.vmem [#allocation8], %s839
        %s841 = sand.u32 %s138, 1
        %s842 = scalar_lea.sflag [#allocation10], %s841
        %s843 = sand.u32 %s138, 1
        %s844 = smul.addr %s843, 2
        %s845 = scalar_lea.vmem [#allocation9], %s844
        // Predicated region
        $region45: #{tpu_custom_call.1} parent=27 // pred_check
          %p846 = pneg %p120
        $region46: #{tpu_custom_call.1} parent=27 // pred_check_branch
          %848 = sbr.rel (%p846) target = $region48
        $region47: #{tpu_custom_call.1} parent=27 // pred_region
          %s849 = smul.u32 32, %s30
          %s851 = ssub.s32 4096, 4096
          %852 = vsyncadd %s837, %s851
          %s853 = sadd.s32 %s31, %s849
          %s854 = smul.addr %s853, 128
          %s855 = scalar_lea.hbm %s2, %s854
          %s856 = sshll.u32 %s840, 4
          %s857 = int_to_ptr.vmem [resolvable:$true] %s856
          %862 = dma.vmem_to_hbm [thread:$0]  %s857, 4096, %s855, %s837, 128, 128, 8
        $region48: #{tpu_custom_call.1} parent=27 // pred_fallthru
          _
        // Predicated region
        $region49: #{tpu_custom_call.1} parent=27 // pred_check
          %p863 = pneg %p148
        $region50: #{tpu_custom_call.1} parent=27 // pred_check_branch
          %865 = sbr.rel (%p863) target = $region52
        $region51: #{tpu_custom_call.1} parent=27 // pred_region
          %s867 = ssub.s32 32, 32
          %868 = vsyncadd %s842, %s867
          %s869 = sadd.s32 %s31, %s30
          %s870 = smul.addr %s869, 32
          %s871 = scalar_lea.hbm %s3, %s870
          %s873 = sshll.u32 %s845, 4
          %s874 = int_to_ptr.vmem [resolvable:$true] %s873
          %876 = dma.vmem_to_hbm [thread:$0]  %s874, 32, %s871, %s842
        $region52: #{tpu_custom_call.1} parent=27 // pred_fallthru
          _
      $region28: #{tpu_custom_call.1} parent=5 // pred_fallthru
        _
      %p877 = scmp.le.s32.totalorder 2, %s20
      // Predicated region
      $region53: #{tpu_custom_call.1} parent=5 // pred_check
        %p878 = pneg %p877
      $region54: #{tpu_custom_call.1} parent=5 // pred_check_branch
        %880 = sbr.rel (%p878) target = $region56
      $region55: #{tpu_custom_call.1} parent=5 // pred_region
        %s881 = ssub.s32 %s20, 2
        // Predicated region
        $region57: #{tpu_custom_call.1} parent=55 // pred_check
          %p882 = pneg %p126
        $region58: #{tpu_custom_call.1} parent=55 // pred_check_branch
          %884 = sbr.rel (%p882) target = $region60
        $region59: #{tpu_custom_call.1} parent=55 // pred_region
          %s885 = sand.u32 %s111, 1
          %s886 = scalar_lea.sflag [#allocation5], %s885
          %s887 = sand.u32 %s111, 1
          %s888 = smul.addr %s887, 256
          %s889 = scalar_lea.vmem [#allocation8], %s888
          %890 = dma.done %s886, 4096
        $region60: #{tpu_custom_call.1} parent=55 // pred_fallthru
          _
        // Predicated region
        $region61: #{tpu_custom_call.1} parent=55 // pred_check
          %p891 = pneg %p154
        $region62: #{tpu_custom_call.1} parent=55 // pred_check_branch
          %893 = sbr.rel (%p891) target = $region64
        $region63: #{tpu_custom_call.1} parent=55 // pred_region
          %s894 = sand.u32 %s139, 1
          %s895 = scalar_lea.sflag [#allocation10], %s894
          %s896 = sand.u32 %s139, 1
          %s897 = smul.addr %s896, 2
          %s898 = scalar_lea.vmem [#allocation9], %s897
          %899 = dma.done %s895, 32
        $region64: #{tpu_custom_call.1} parent=55 // pred_fallthru
          _
      $region56: #{tpu_custom_call.1} parent=5 // pred_fallthru
        _
    $region6: #{tpu_custom_call.1} parent=1 // loop_footer
      %s24 = sadd.s32 1, %s20
    $region7: #{tpu_custom_call.1} parent=1 // loop_footer_branch
      %19 = sbr.rel target = $region3
    $region8: #{tpu_custom_call.1} parent=1 // loop_exit
      _
    %900 = vsyncpa [#allocation4], 1
    %s901 = scalar_lea.sflag [#allocation4], 1
    %902 = vsyncpa %s901, 1
    %903 = vsyncpa [#allocation7], 1
    %904 = vsyncpa [#allocation5], 1
    %s905 = scalar_lea.sflag [#allocation5], 1
    %906 = vsyncpa %s905, 1
    %907 = vsyncpa [#allocation10], 1
    %s908 = scalar_lea.sflag [#allocation10], 1
    %909 = vsyncpa %s908, 1

</llo_original>
